<compile_context>
chip_gen: v7x
topology: tpu7x:2x2x1
jax: 0.10.0
libtpu: 0.0.40
codegen_flags: <defaults>
</compile_context>

<pallas_src>
import functools
from typing import NamedTuple

import jax
import jax.numpy as jnp
from jax import lax
from jax.experimental import pallas as pl
from jax.experimental.pallas import tpu as pltpu

LANE = 128
SUBLANE = 8


def _round_up(x: int, m: int) -> int:
    return ((x + m - 1) // m) * m


# --------------------------------------------------------------------------- #
# Kernel
# --------------------------------------------------------------------------- #
def lstm_last_kernel(x_ref, w_big_ref, small_ref, out_ref, xb_ref, *,
                     hidden_size: int):
    # x_ref:     (T, bt, 1)           f32 VMEM  time-major sequence block
    # w_big_ref: (H, 4H + o_pad)      f32 VMEM  [ W_hh^T | W_lin^T (lane-padded) ]
    # small_ref: (8, 4H + o_pad)      f32 VMEM  row0 W_ih^T, row1 b_ih+b_hh,
    #                                           row2 b_lin (lane-padded)
    # out_ref:   (bt, o_pad)          f32 VMEM  lane-padded output tile
    # xb_ref:    (T, bt, 4H)          f32 VMEM  scratch: per-step input projection
    H = hidden_size
    H4 = 4 * H
    T, bt, _ = x_ref.shape
    o_pad = w_big_ref.shape[1] - H4

    # ---- packed-parameter views (static, lane-aligned slices) ----
    w_hh = w_big_ref[:, 0:H4]                          # (H, 4H)
    w_ih = small_ref[0:1, 0:H4]                        # (1, 4H)  (input_size = 1)
    bias = small_ref[1:2, 0:H4]                        # (1, 4H)  b_ih + b_hh

    # ---- prologue: input projection for every timestep, off the serial chain.
    # xb[t, b, :] = x[b, t] * W_ih^T + bias  -> time-major VMEM scratch so each
    # step's gate input is a contiguous VMEM load with no dependence on h.
    xb_ref[...] = x_ref[...] * w_ih.reshape(1, 1, H4) + bias.reshape(1, 1, H4)

    h = jnp.zeros((bt, H), jnp.float32)
    c = jnp.zeros((bt, H), jnp.float32)

    # ---- fully unrolled recurrence (T is a compile-time constant): the LLO
    # scheduler sees all steps; per-step critical path = MXU fill + 2 dependent
    # EUP launches + VALU.  Gate slices live at 32-lane offsets of one vreg
    # (compact layout kept; per-gate 128-lane padding only if rotates show up
    # in the bundle dump — measure before committing).
    for t in range(T):
        gates = xb_ref[t] + jnp.dot(h, w_hh,
                                    preferred_element_type=jnp.float32)  # (bt, 4H)
        sig = jax.nn.sigmoid(gates)        # one full-vreg EUP launch
        tnh = jnp.tanh(gates)              # one full-vreg EUP launch
        i_g = sig[:, 0 * H:1 * H]
        f_g = sig[:, 1 * H:2 * H]
        g_g = tnh[:, 2 * H:3 * H]
        o_g = sig[:, 3 * H:4 * H]
        c = f_g * c + i_g * g_g
        h = o_g * jnp.tanh(c)

    # ---- lane-dense linear head: padded weights -> unmasked full-vreg store.
    w_lin = w_big_ref[:, H4:H4 + o_pad]                # (H, o_pad)
    b_lin = small_ref[2:3, H4:H4 + o_pad]              # (1, o_pad)
    out_ref[...] = jnp.dot(h, w_lin,
                           preferred_element_type=jnp.float32) + b_lin


# --------------------------------------------------------------------------- #
# Parameter packing (one-time, host/XLA side — NOT per-call work)
# --------------------------------------------------------------------------- #
class PackedParams(NamedTuple):
    w_big: jax.Array       # (H, 4H + o_pad)
    small: jax.Array       # (8, 4H + o_pad)
    hidden_size: int
    output_size: int
    o_pad: int


def pack_params(params) -> PackedParams:
    """Concatenate the 6 small parameter arrays into 2 lane-dense VMEM slabs."""
    w_ih_t, w_hh_t, b, w_lin_t, b_lin = params
    H = w_hh_t.shape[0]
    H4 = 4 * H
    out_size = w_lin_t.shape[1]
    o_pad = _round_up(max(out_size, LANE), LANE)

    w_big = jnp.zeros((H, H4 + o_pad), jnp.float32)
    w_big = w_big.at[:, :H4].set(w_hh_t.astype(jnp.float32))
    w_big = w_big.at[:, H4:H4 + out_size].set(w_lin_t.astype(jnp.float32))

    small = jnp.zeros((SUBLANE, H4 + o_pad), jnp.float32)
    small = small.at[0, :H4].set(w_ih_t.reshape(-1).astype(jnp.float32))
    small = small.at[1, :H4].set(b.reshape(-1).astype(jnp.float32))
    small = small.at[2, H4:H4 + out_size].set(b_lin.reshape(-1).astype(jnp.float32))

    return PackedParams(w_big, small, H, out_size, o_pad)


# --------------------------------------------------------------------------- #
# Forward wrappers
# --------------------------------------------------------------------------- #
def vanilla_rnn_forward_batched(sequences, packed: PackedParams, *,
                                batch_tile: int = 128):
    """sequences: (B, T) f32. Returns (B, output_size): x[-1] for each sequence."""
    B, T = sequences.shape
    H, o_pad = packed.hidden_size, packed.o_pad
    H4 = 4 * H

    bt = _round_up(min(batch_tile, _round_up(B, SUBLANE)), SUBLANE)
    B_pad = _round_up(B, bt)
    n_tiles = B_pad // bt

    x_pad = jnp.zeros((B_pad, T), jnp.float32).at[:B, :].set(
        sequences.astype(jnp.float32))
    # Time-major, lane-size-1 layout so the in-kernel input projection is a pure
    # lane broadcast (layout plumbing only; no compute hoisted into the wrapper).
    x3 = jnp.transpose(x_pad)[:, :, None]              # (T, B_pad, 1)

    kernel = functools.partial(lstm_last_kernel, hidden_size=H)

    out_padded = pl.pallas_call(
        kernel,
        out_shape=jax.ShapeDtypeStruct((B_pad, o_pad), jnp.float32),
        grid=(n_tiles,),
        in_specs=[
            pl.BlockSpec((T, bt, 1), lambda i: (0, i, 0)),
            pl.BlockSpec((H, H4 + o_pad), lambda i: (0, 0)),
            pl.BlockSpec((SUBLANE, H4 + o_pad), lambda i: (0, 0)),
        ],
        out_specs=pl.BlockSpec((bt, o_pad), lambda i: (i, 0)),
        scratch_shapes=[pltpu.VMEM((T, bt, H4), jnp.float32)],
        compiler_params=pltpu.CompilerParams(
            dimension_semantics=("parallel",)),      # shards batch tiles on v7x
    )(x3, packed.w_big, packed.small)

    return out_padded[:B, :packed.output_size]


def vanilla_rnn_forward(sequence, packed: PackedParams):
    """sequence: (T,) f32. Returns (1, output_size) == PyTorch x[-1]."""
    return vanilla_rnn_forward_batched(sequence.reshape(1, -1), packed)


# --------------------------------------------------------------------------- #
# Init + pure-JAX reference (mirrors PyTorch nn.LSTM + nn.Linear, return x[-1])
# --------------------------------------------------------------------------- #
def init_params(key, hidden_size, output_size):
    """Deterministic synthetic params (PyTorch-style uniform +-1/sqrt(H))."""
    H, O = hidden_size, output_size
    k = jax.random.split(key, 6)
    bound = 1.0 / jnp.sqrt(H)
    # PyTorch stores weight_ih (4H, 1), weight_hh (4H, H); we keep transposes.
    w_ih_t = jax.random.uniform(k[0], (1, 4 * H), jnp.float32, -bound, bound)
    w_hh_t = jax.random.uniform(k[1], (H, 4 * H), jnp.float32, -bound, bound)
    b_ih = jax.random.uniform(k[2], (1, 4 * H), jnp.float32, -bound, bound)
    b_hh = jax.random.uniform(k[3], (1, 4 * H), jnp.float32, -bound, bound)
    b = b_ih + b_hh
    w_lin_t = jax.random.uniform(k[4], (H, O), jnp.float32, -bound, bound)
    b_lin = jax.random.uniform(k[5], (1, O), jnp.float32, -bound, bound)
    return (w_ih_t, w_hh_t, b, w_lin_t, b_lin)


def reference_forward(sequence, params):
    w_ih_t, w_hh_t, b, w_lin_t, b_lin = params
    H = w_hh_t.shape[0]

    def step(carry, x_t):
        h, c = carry
        gates = (x_t * w_ih_t
                 + jnp.dot(h, w_hh_t, precision=lax.Precision.HIGHEST) + b)
        i_g = jax.nn.sigmoid(gates[:, 0 * H:1 * H])
        f_g = jax.nn.sigmoid(gates[:, 1 * H:2 * H])
        g_g = jnp.tanh(gates[:, 2 * H:3 * H])
        o_g = jax.nn.sigmoid(gates[:, 3 * H:4 * H])
        c = f_g * c + i_g * g_g
        h = o_g * jnp.tanh(c)
        return (h, c), None

    h0 = jnp.zeros((1, H), jnp.float32)
    c0 = jnp.zeros((1, H), jnp.float32)
    (h_T, _), _ = lax.scan(step, (h0, c0), sequence.reshape(-1))
    return jnp.dot(h_T, w_lin_t, precision=lax.Precision.HIGHEST) + b_lin


# --------------------------------------------------------------------------- #
if __name__ == "__main__":
    seq_len = 8
    input_future = 1      # forward reshapes to (-1, 1, 1) => input_size must be 1
    hidden_size = 32
    output_size = 4

    key = jax.random.PRNGKey(0)
    k_x, k_p, k_b = jax.random.split(key, 3)
    sequence = jax.random.normal(k_x, (seq_len,), jnp.float32)
    params = init_params(k_p, hidden_size, output_size)
    packed = pack_params(params)      # one-time host-side packing

    # ---- module-equivalent single-sequence forward (B = 1 path) ----
    out = jax.block_until_ready(vanilla_rnn_forward(sequence, packed))
    ref = reference_forward(sequence, params)
    assert out.shape == (1, output_size)
    assert jnp.allclose(out, ref, rtol=1e-5, atol=1e-5), (out, ref)

    # ---- batched path: the main perf lever (fills MXU sublanes, amortizes launch) ----
    batch = 4
    seqs = jax.random.normal(k_b, (batch, seq_len), jnp.float32)
    out_b = jax.block_until_ready(vanilla_rnn_forward_batched(seqs, packed))
    ref_b = jnp.concatenate(
        [reference_forward(seqs[i], params) for i in range(batch)], axis=0)
    assert out_b.shape == (batch, output_size)
    assert jnp.allclose(out_b, ref_b, rtol=1e-5, atol=1e-5), (out_b, ref_b)

    print("KERNEL_OK")
</pallas_src>

<mosaic_0001>
module attributes {stable_mosaic.version = 11 : i64} {
  func.func @lstm_last_kernel(%arg0: i32, %arg1: memref<8x8x1xf32, #tpu.memory_space<vmem>>, %arg2: memref<32x256xf32, #tpu.memory_space<vmem>>, %arg3: memref<8x256xf32, #tpu.memory_space<vmem>>, %arg4: memref<8x128xf32, #tpu.memory_space<vmem>>, %arg5: memref<8x8x128xf32, #tpu.memory_space<vmem>>) attributes {dimension_semantics = [#tpu.dimension_semantics<parallel>], iteration_bounds = array<i64: 1>, scalar_prefetch = 0 : i64, scratch_operands = 1 : i64, tpu.core_type = #tpu.core_type<tc>, window_params = [{transform_indices = @transform_0, window_bounds = array<i64: 8, 8, 1>}, {pipeline_mode = #tpu.pipeline_mode<synchronous>, transform_indices = @transform_1, window_bounds = array<i64: 32, 256>}, {pipeline_mode = #tpu.pipeline_mode<synchronous>, transform_indices = @transform_2, window_bounds = array<i64: 8, 256>}, {transform_indices = @transform_3, window_bounds = array<i64: 8, 128>}]} {
    %c0 = arith.constant 0 : index
    %c0_0 = arith.constant 0 : index
    %0 = vector.load %arg2[%c0, %c0_0] : memref<32x256xf32, #tpu.memory_space<vmem>>, vector<32x128xf32>
    %c0_1 = arith.constant 0 : index
    %c0_2 = arith.constant 0 : index
    %1 = vector.load %arg3[%c0_1, %c0_2] : memref<8x256xf32, #tpu.memory_space<vmem>>, vector<1x128xf32>
    %c1 = arith.constant 1 : index
    %c0_3 = arith.constant 0 : index
    %2 = vector.load %arg3[%c1, %c0_3] : memref<8x256xf32, #tpu.memory_space<vmem>>, vector<1x128xf32>
    %c0_4 = arith.constant 0 : index
    %c0_5 = arith.constant 0 : index
    %c0_6 = arith.constant 0 : index
    %3 = vector.load %arg1[%c0_4, %c0_5, %c0_6] : memref<8x8x1xf32, #tpu.memory_space<vmem>>, vector<8x8x1xf32>
    %4 = vector.shape_cast %1 : vector<1x128xf32> to vector<1x1x128xf32>
    %5 = vector.broadcast %3 : vector<8x8x1xf32> to vector<8x8x128xf32>
    %6 = vector.broadcast %4 : vector<1x1x128xf32> to vector<8x8x128xf32>
    %7 = arith.mulf %5, %6 : vector<8x8x128xf32>
    %8 = vector.shape_cast %2 : vector<1x128xf32> to vector<1x1x128xf32>
    %9 = vector.broadcast %8 : vector<1x1x128xf32> to vector<8x8x128xf32>
    %10 = arith.addf %7, %9 : vector<8x8x128xf32>
    %c0_7 = arith.constant 0 : index
    %c0_8 = arith.constant 0 : index
    %c0_9 = arith.constant 0 : index
    %11 = vector.load %arg5[%c0_7, %c0_8, %c0_9] : memref<8x8x128xf32, #tpu.memory_space<vmem>>, vector<8x8x128xf32>
    tpu.vector_store %arg5[%c0_7, %c0_8, %c0_9], %10 {strides = array<i32>} : memref<8x8x128xf32, #tpu.memory_space<vmem>>, vector<8x8x128xf32>,
    %cst = arith.constant 0.000000e+00 : f32
    %12 = vector.broadcast %cst : f32 to vector<8x32xf32>
    %cst_10 = arith.constant 0.000000e+00 : f32
    %13 = vector.broadcast %cst_10 : f32 to vector<8x32xf32>
    %c0_11 = arith.constant 0 : index
    %c0_12 = arith.constant 0 : index
    %c0_13 = arith.constant 0 : index
    %14 = vector.load %arg5[%c0_11, %c0_12, %c0_13] : memref<8x8x128xf32, #tpu.memory_space<vmem>>, vector<1x8x128xf32>
    %15 = vector.shape_cast %14 : vector<1x8x128xf32> to vector<8x128xf32>
    %cst_14 = arith.constant dense<0.000000e+00> : vector<8x128xf32>
    %16 = tpu.matmul %12, %0, %cst_14 {dimension_numbers = #tpu.dot_dimension_numbers<[1], [0], [0], [1], [0, 0, 1, 1], [], []>} : vector<8x32xf32>, vector<32x128xf32>, vector<8x128xf32> -> vector<8x128xf32>
    %17 = arith.addf %15, %16 : vector<8x128xf32>
    %18 = arith.negf %17 : vector<8x128xf32>
    %19 = math.exp %18 : vector<8x128xf32>
    %cst_15 = arith.constant 1.000000e+00 : f32
    %20 = vector.broadcast %cst_15 : f32 to vector<8x128xf32>
    %21 = arith.addf %20, %19 : vector<8x128xf32>
    %22 = arith.divf %20, %21 : vector<8x128xf32>
    %23 = math.tanh %17 : vector<8x128xf32>
    %24 = vector.extract_strided_slice %22 {offsets = [0, 0], sizes = [8, 32], strides = [1, 1]} : vector<8x128xf32> to vector<8x32xf32>
    %25 = vector.extract_strided_slice %22 {offsets = [0, 32], sizes = [8, 32], strides = [1, 1]} : vector<8x128xf32> to vector<8x32xf32>
    %26 = vector.extract_strided_slice %23 {offsets = [0, 64], sizes = [8, 32], strides = [1, 1]} : vector<8x128xf32> to vector<8x32xf32>
    %27 = vector.extract_strided_slice %22 {offsets = [0, 96], sizes = [8, 32], strides = [1, 1]} : vector<8x128xf32> to vector<8x32xf32>
    %28 = arith.mulf %25, %13 : vector<8x32xf32>
    %29 = arith.mulf %24, %26 : vector<8x32xf32>
    %30 = arith.addf %28, %29 : vector<8x32xf32>
    %31 = math.tanh %30 : vector<8x32xf32>
    %32 = arith.mulf %27, %31 : vector<8x32xf32>
    %c1_16 = arith.constant 1 : index
    %c0_17 = arith.constant 0 : index
    %c0_18 = arith.constant 0 : index
    %33 = vector.load %arg5[%c1_16, %c0_17, %c0_18] : memref<8x8x128xf32, #tpu.memory_space<vmem>>, vector<1x8x128xf32>
    %34 = vector.shape_cast %33 : vector<1x8x128xf32> to vector<8x128xf32>
    %cst_19 = arith.constant dense<0.000000e+00> : vector<8x128xf32>
    %35 = tpu.matmul %32, %0, %cst_19 {dimension_numbers = #tpu.dot_dimension_numbers<[1], [0], [0], [1], [0, 0, 1, 1], [], []>} : vector<8x32xf32>, vector<32x128xf32>, vector<8x128xf32> -> vector<8x128xf32>
    %36 = arith.addf %34, %35 : vector<8x128xf32>
    %37 = arith.negf %36 : vector<8x128xf32>
    %38 = math.exp %37 : vector<8x128xf32>
    %cst_20 = arith.constant 1.000000e+00 : f32
    %39 = vector.broadcast %cst_20 : f32 to vector<8x128xf32>
    %40 = arith.addf %39, %38 : vector<8x128xf32>
    %41 = arith.divf %39, %40 : vector<8x128xf32>
    %42 = math.tanh %36 : vector<8x128xf32>
    %43 = vector.extract_strided_slice %41 {offsets = [0, 0], sizes = [8, 32], strides = [1, 1]} : vector<8x128xf32> to vector<8x32xf32>
    %44 = vector.extract_strided_slice %41 {offsets = [0, 32], sizes = [8, 32], strides = [1, 1]} : vector<8x128xf32> to vector<8x32xf32>
    %45 = vector.extract_strided_slice %42 {offsets = [0, 64], sizes = [8, 32], strides = [1, 1]} : vector<8x128xf32> to vector<8x32xf32>
    %46 = vector.extract_strided_slice %41 {offsets = [0, 96], sizes = [8, 32], strides = [1, 1]} : vector<8x128xf32> to vector<8x32xf32>
    %47 = arith.mulf %44, %30 : vector<8x32xf32>
    %48 = arith.mulf %43, %45 : vector<8x32xf32>
    %49 = arith.addf %47, %48 : vector<8x32xf32>
    %50 = math.tanh %49 : vector<8x32xf32>
    %51 = arith.mulf %46, %50 : vector<8x32xf32>
    %c2 = arith.constant 2 : index
    %c0_21 = arith.constant 0 : index
    %c0_22 = arith.constant 0 : index
    %52 = vector.load %arg5[%c2, %c0_21, %c0_22] : memref<8x8x128xf32, #tpu.memory_space<vmem>>, vector<1x8x128xf32>
    %53 = vector.shape_cast %52 : vector<1x8x128xf32> to vector<8x128xf32>
    %cst_23 = arith.constant dense<0.000000e+00> : vector<8x128xf32>
    %54 = tpu.matmul %51, %0, %cst_23 {dimension_numbers = #tpu.dot_dimension_numbers<[1], [0], [0], [1], [0, 0, 1, 1], [], []>} : vector<8x32xf32>, vector<32x128xf32>, vector<8x128xf32> -> vector<8x128xf32>
    %55 = arith.addf %53, %54 : vector<8x128xf32>
    %56 = arith.negf %55 : vector<8x128xf32>
    %57 = math.exp %56 : vector<8x128xf32>
    %cst_24 = arith.constant 1.000000e+00 : f32
    %58 = vector.broadcast %cst_24 : f32 to vector<8x128xf32>
    %59 = arith.addf %58, %57 : vector<8x128xf32>
    %60 = arith.divf %58, %59 : vector<8x128xf32>
    %61 = math.tanh %55 : vector<8x128xf32>
    %62 = vector.extract_strided_slice %60 {offsets = [0, 0], sizes = [8, 32], strides = [1, 1]} : vector<8x128xf32> to vector<8x32xf32>
    %63 = vector.extract_strided_slice %60 {offsets = [0, 32], sizes = [8, 32], strides = [1, 1]} : vector<8x128xf32> to vector<8x32xf32>
    %64 = vector.extract_strided_slice %61 {offsets = [0, 64], sizes = [8, 32], strides = [1, 1]} : vector<8x128xf32> to vector<8x32xf32>
    %65 = vector.extract_strided_slice %60 {offsets = [0, 96], sizes = [8, 32], strides = [1, 1]} : vector<8x128xf32> to vector<8x32xf32>
    %66 = arith.mulf %63, %49 : vector<8x32xf32>
    %67 = arith.mulf %62, %64 : vector<8x32xf32>
    %68 = arith.addf %66, %67 : vector<8x32xf32>
    %69 = math.tanh %68 : vector<8x32xf32>
    %70 = arith.mulf %65, %69 : vector<8x32xf32>
    %c3 = arith.constant 3 : index
    %c0_25 = arith.constant 0 : index
    %c0_26 = arith.constant 0 : index
    %71 = vector.load %arg5[%c3, %c0_25, %c0_26] : memref<8x8x128xf32, #tpu.memory_space<vmem>>, vector<1x8x128xf32>
    %72 = vector.shape_cast %71 : vector<1x8x128xf32> to vector<8x128xf32>
    %cst_27 = arith.constant dense<0.000000e+00> : vector<8x128xf32>
    %73 = tpu.matmul %70, %0, %cst_27 {dimension_numbers = #tpu.dot_dimension_numbers<[1], [0], [0], [1], [0, 0, 1, 1], [], []>} : vector<8x32xf32>, vector<32x128xf32>, vector<8x128xf32> -> vector<8x128xf32>
    %74 = arith.addf %72, %73 : vector<8x128xf32>
    %75 = arith.negf %74 : vector<8x128xf32>
    %76 = math.exp %75 : vector<8x128xf32>
    %cst_28 = arith.constant 1.000000e+00 : f32
    %77 = vector.broadcast %cst_28 : f32 to vector<8x128xf32>
    %78 = arith.addf %77, %76 : vector<8x128xf32>
    %79 = arith.divf %77, %78 : vector<8x128xf32>
    %80 = math.tanh %74 : vector<8x128xf32>
    %81 = vector.extract_strided_slice %79 {offsets = [0, 0], sizes = [8, 32], strides = [1, 1]} : vector<8x128xf32> to vector<8x32xf32>
    %82 = vector.extract_strided_slice %79 {offsets = [0, 32], sizes = [8, 32], strides = [1, 1]} : vector<8x128xf32> to vector<8x32xf32>
    %83 = vector.extract_strided_slice %80 {offsets = [0, 64], sizes = [8, 32], strides = [1, 1]} : vector<8x128xf32> to vector<8x32xf32>
    %84 = vector.extract_strided_slice %79 {offsets = [0, 96], sizes = [8, 32], strides = [1, 1]} : vector<8x128xf32> to vector<8x32xf32>
    %85 = arith.mulf %82, %68 : vector<8x32xf32>
    %86 = arith.mulf %81, %83 : vector<8x32xf32>
    %87 = arith.addf %85, %86 : vector<8x32xf32>
    %88 = math.tanh %87 : vector<8x32xf32>
    %89 = arith.mulf %84, %88 : vector<8x32xf32>
    %c4 = arith.constant 4 : index
    %c0_29 = arith.constant 0 : index
    %c0_30 = arith.constant 0 : index
    %90 = vector.load %arg5[%c4, %c0_29, %c0_30] : memref<8x8x128xf32, #tpu.memory_space<vmem>>, vector<1x8x128xf32>
    %91 = vector.shape_cast %90 : vector<1x8x128xf32> to vector<8x128xf32>
    %cst_31 = arith.constant dense<0.000000e+00> : vector<8x128xf32>
    %92 = tpu.matmul %89, %0, %cst_31 {dimension_numbers = #tpu.dot_dimension_numbers<[1], [0], [0], [1], [0, 0, 1, 1], [], []>} : vector<8x32xf32>, vector<32x128xf32>, vector<8x128xf32> -> vector<8x128xf32>
    %93 = arith.addf %91, %92 : vector<8x128xf32>
    %94 = arith.negf %93 : vector<8x128xf32>
    %95 = math.exp %94 : vector<8x128xf32>
    %cst_32 = arith.constant 1.000000e+00 : f32
    %96 = vector.broadcast %cst_32 : f32 to vector<8x128xf32>
    %97 = arith.addf %96, %95 : vector<8x128xf32>
    %98 = arith.divf %96, %97 : vector<8x128xf32>
    %99 = math.tanh %93 : vector<8x128xf32>
    %100 = vector.extract_strided_slice %98 {offsets = [0, 0], sizes = [8, 32], strides = [1, 1]} : vector<8x128xf32> to vector<8x32xf32>
    %101 = vector.extract_strided_slice %98 {offsets = [0, 32], sizes = [8, 32], strides = [1, 1]} : vector<8x128xf32> to vector<8x32xf32>
    %102 = vector.extract_strided_slice %99 {offsets = [0, 64], sizes = [8, 32], strides = [1, 1]} : vector<8x128xf32> to vector<8x32xf32>
    %103 = vector.extract_strided_slice %98 {offsets = [0, 96], sizes = [8, 32], strides = [1, 1]} : vector<8x128xf32> to vector<8x32xf32>
    %104 = arith.mulf %101, %87 : vector<8x32xf32>
    %105 = arith.mulf %100, %102 : vector<8x32xf32>
    %106 = arith.addf %104, %105 : vector<8x32xf32>
    %107 = math.tanh %106 : vector<8x32xf32>
    %108 = arith.mulf %103, %107 : vector<8x32xf32>
    %c5 = arith.constant 5 : index
    %c0_33 = arith.constant 0 : index
    %c0_34 = arith.constant 0 : index
    %109 = vector.load %arg5[%c5, %c0_33, %c0_34] : memref<8x8x128xf32, #tpu.memory_space<vmem>>, vector<1x8x128xf32>
    %110 = vector.shape_cast %109 : vector<1x8x128xf32> to vector<8x128xf32>
    %cst_35 = arith.constant dense<0.000000e+00> : vector<8x128xf32>
    %111 = tpu.matmul %108, %0, %cst_35 {dimension_numbers = #tpu.dot_dimension_numbers<[1], [0], [0], [1], [0, 0, 1, 1], [], []>} : vector<8x32xf32>, vector<32x128xf32>, vector<8x128xf32> -> vector<8x128xf32>
    %112 = arith.addf %110, %111 : vector<8x128xf32>
    %113 = arith.negf %112 : vector<8x128xf32>
    %114 = math.exp %113 : vector<8x128xf32>
    %cst_36 = arith.constant 1.000000e+00 : f32
    %115 = vector.broadcast %cst_36 : f32 to vector<8x128xf32>
    %116 = arith.addf %115, %114 : vector<8x128xf32>
    %117 = arith.divf %115, %116 : vector<8x128xf32>
    %118 = math.tanh %112 : vector<8x128xf32>
    %119 = vector.extract_strided_slice %117 {offsets = [0, 0], sizes = [8, 32], strides = [1, 1]} : vector<8x128xf32> to vector<8x32xf32>
    %120 = vector.extract_strided_slice %117 {offsets = [0, 32], sizes = [8, 32], strides = [1, 1]} : vector<8x128xf32> to vector<8x32xf32>
    %121 = vector.extract_strided_slice %118 {offsets = [0, 64], sizes = [8, 32], strides = [1, 1]} : vector<8x128xf32> to vector<8x32xf32>
    %122 = vector.extract_strided_slice %117 {offsets = [0, 96], sizes = [8, 32], strides = [1, 1]} : vector<8x128xf32> to vector<8x32xf32>
    %123 = arith.mulf %120, %106 : vector<8x32xf32>
    %124 = arith.mulf %119, %121 : vector<8x32xf32>
    %125 = arith.addf %123, %124 : vector<8x32xf32>
    %126 = math.tanh %125 : vector<8x32xf32>
    %127 = arith.mulf %122, %126 : vector<8x32xf32>
    %c6 = arith.constant 6 : index
    %c0_37 = arith.constant 0 : index
    %c0_38 = arith.constant 0 : index
    %128 = vector.load %arg5[%c6, %c0_37, %c0_38] : memref<8x8x128xf32, #tpu.memory_space<vmem>>, vector<1x8x128xf32>
    %129 = vector.shape_cast %128 : vector<1x8x128xf32> to vector<8x128xf32>
    %cst_39 = arith.constant dense<0.000000e+00> : vector<8x128xf32>
    %130 = tpu.matmul %127, %0, %cst_39 {dimension_numbers = #tpu.dot_dimension_numbers<[1], [0], [0], [1], [0, 0, 1, 1], [], []>} : vector<8x32xf32>, vector<32x128xf32>, vector<8x128xf32> -> vector<8x128xf32>
    %131 = arith.addf %129, %130 : vector<8x128xf32>
    %132 = arith.negf %131 : vector<8x128xf32>
    %133 = math.exp %132 : vector<8x128xf32>
    %cst_40 = arith.constant 1.000000e+00 : f32
    %134 = vector.broadcast %cst_40 : f32 to vector<8x128xf32>
    %135 = arith.addf %134, %133 : vector<8x128xf32>
    %136 = arith.divf %134, %135 : vector<8x128xf32>
    %137 = math.tanh %131 : vector<8x128xf32>
    %138 = vector.extract_strided_slice %136 {offsets = [0, 0], sizes = [8, 32], strides = [1, 1]} : vector<8x128xf32> to vector<8x32xf32>
    %139 = vector.extract_strided_slice %136 {offsets = [0, 32], sizes = [8, 32], strides = [1, 1]} : vector<8x128xf32> to vector<8x32xf32>
    %140 = vector.extract_strided_slice %137 {offsets = [0, 64], sizes = [8, 32], strides = [1, 1]} : vector<8x128xf32> to vector<8x32xf32>
    %141 = vector.extract_strided_slice %136 {offsets = [0, 96], sizes = [8, 32], strides = [1, 1]} : vector<8x128xf32> to vector<8x32xf32>
    %142 = arith.mulf %139, %125 : vector<8x32xf32>
    %143 = arith.mulf %138, %140 : vector<8x32xf32>
    %144 = arith.addf %142, %143 : vector<8x32xf32>
    %145 = math.tanh %144 : vector<8x32xf32>
    %146 = arith.mulf %141, %145 : vector<8x32xf32>
    %c7 = arith.constant 7 : index
    %c0_41 = arith.constant 0 : index
    %c0_42 = arith.constant 0 : index
    %147 = vector.load %arg5[%c7, %c0_41, %c0_42] : memref<8x8x128xf32, #tpu.memory_space<vmem>>, vector<1x8x128xf32>
    %148 = vector.shape_cast %147 : vector<1x8x128xf32> to vector<8x128xf32>
    %cst_43 = arith.constant dense<0.000000e+00> : vector<8x128xf32>
    %149 = tpu.matmul %146, %0, %cst_43 {dimension_numbers = #tpu.dot_dimension_numbers<[1], [0], [0], [1], [0, 0, 1, 1], [], []>} : vector<8x32xf32>, vector<32x128xf32>, vector<8x128xf32> -> vector<8x128xf32>
    %150 = arith.addf %148, %149 : vector<8x128xf32>
    %151 = arith.negf %150 : vector<8x128xf32>
    %152 = math.exp %151 : vector<8x128xf32>
    %cst_44 = arith.constant 1.000000e+00 : f32
    %153 = vector.broadcast %cst_44 : f32 to vector<8x128xf32>
    %154 = arith.addf %153, %152 : vector<8x128xf32>
    %155 = arith.divf %153, %154 : vector<8x128xf32>
    %156 = math.tanh %150 : vector<8x128xf32>
    %157 = vector.extract_strided_slice %155 {offsets = [0, 0], sizes = [8, 32], strides = [1, 1]} : vector<8x128xf32> to vector<8x32xf32>
    %158 = vector.extract_strided_slice %155 {offsets = [0, 32], sizes = [8, 32], strides = [1, 1]} : vector<8x128xf32> to vector<8x32xf32>
    %159 = vector.extract_strided_slice %156 {offsets = [0, 64], sizes = [8, 32], strides = [1, 1]} : vector<8x128xf32> to vector<8x32xf32>
    %160 = vector.extract_strided_slice %155 {offsets = [0, 96], sizes = [8, 32], strides = [1, 1]} : vector<8x128xf32> to vector<8x32xf32>
    %161 = arith.mulf %158, %144 : vector<8x32xf32>
    %162 = arith.mulf %157, %159 : vector<8x32xf32>
    %163 = arith.addf %161, %162 : vector<8x32xf32>
    %164 = math.tanh %163 : vector<8x32xf32>
    %165 = arith.mulf %160, %164 : vector<8x32xf32>
    %c0_45 = arith.constant 0 : index
    %c128 = arith.constant 128 : index
    %166 = vector.load %arg2[%c0_45, %c128] : memref<32x256xf32, #tpu.memory_space<vmem>>, vector<32x128xf32>
    %c2_46 = arith.constant 2 : index
    %c128_47 = arith.constant 128 : index
    %167 = vector.load %arg3[%c2_46, %c128_47] : memref<8x256xf32, #tpu.memory_space<vmem>>, vector<1x128xf32>
    %cst_48 = arith.constant dense<0.000000e+00> : vector<8x128xf32>
    %168 = tpu.matmul %165, %166, %cst_48 {dimension_numbers = #tpu.dot_dimension_numbers<[1], [0], [0], [1], [0, 0, 1, 1], [], []>} : vector<8x32xf32>, vector<32x128xf32>, vector<8x128xf32> -> vector<8x128xf32>
    %169 = vector.broadcast %167 : vector<1x128xf32> to vector<8x128xf32>
    %170 = arith.addf %168, %169 : vector<8x128xf32>
    %c0_49 = arith.constant 0 : index
    %c0_50 = arith.constant 0 : index
    %171 = vector.load %arg4[%c0_49, %c0_50] : memref<8x128xf32, #tpu.memory_space<vmem>>, vector<8x128xf32>
    tpu.vector_store %arg4[%c0_49, %c0_50], %170 {strides = array<i32>} : memref<8x128xf32, #tpu.memory_space<vmem>>, vector<8x128xf32>,
    return
  }
  func.func @transform_0(%arg0: i32) -> (i32, i32, i32) {
    %c0_i32 = arith.constant 0 : i32
    %c0_i32_0 = arith.constant 0 : i32
    %c0_i32_1 = arith.constant 0 : i32
    return %c0_i32, %arg0, %c0_i32_0 : i32, i32, i32
  }
  func.func @transform_1(%arg0: i32) -> (i32, i32) {
    %c0_i32 = arith.constant 0 : i32
    %c0_i32_0 = arith.constant 0 : i32
    %c0_i32_1 = arith.constant 0 : i32
    return %c0_i32, %c0_i32_0 : i32, i32
  }
  func.func @transform_2(%arg0: i32) -> (i32, i32) {
    %c0_i32 = arith.constant 0 : i32
    %c0_i32_0 = arith.constant 0 : i32
    %c0_i32_1 = arith.constant 0 : i32
    return %c0_i32, %c0_i32_0 : i32, i32
  }
  func.func @transform_3(%arg0: i32) -> (i32, i32) {
    %c0_i32 = arith.constant 0 : i32
    %c0_i32_0 = arith.constant 0 : i32
    return %arg0, %c0_i32 : i32, i32
  }
}

</mosaic_0001>

<llo_original>
// kernel: tpu_custom_call.1
$region0: #{tpu_custom_call.1}
  #allocation0 [shape = 'u32[]', space=smem, size = 0x4, offset = 0x4, fixed_abs, tag = 'smem constant byte address 0x4 - core index']
  #allocation1 [shape = 'u32[144,128]{1,0:T(1,128)}', space=vmem, size = 0x12000, scoped, tag = 'internal scratch']
  #allocation2 [shape = 'f32[8,8,128]{2,1,0:T(8,128)}', space=vmem, size = 0x8000, scoped, tag = 'scratch operand']
  %s0 = inlined_call_operand.vmem [shape: f32[8,8,1], index: 0, kind: input, shape index: {}]
  %s1 = inlined_call_operand.vmem [shape: f32[32,256], index: 1, kind: input, shape index: {}]
  %s2 = inlined_call_operand.hbm [shape: f32[8,256], index: 2, kind: input, shape index: {}]
  %s3 = inlined_call_operand.hbm [shape: f32[8,128], index: 3, kind: output, shape index: {}]
  %s4 = sld [smem:[#allocation0]]
  $region26: #{tpu_custom_call.1} parent=0
    _
  %s6 = ssub.s32 1, %s4
  %s7 = scalar_select 0, %s6, %s4
  $region1: #{tpu_custom_call.1} parent=0
    #allocation3 [shape = 'u8[8192]{0}', space=vmem, size = 0x2000, scoped, tag = 'input window, operand 2, single buffered']
    #allocation4 [shape = 's32[1]{0}', space=sflag, size = 0x4, scoped, tag = 'scoped memory for tpu_custom_call.1']
    #allocation5 [shape = 's32[1]{0}', space=sflag, size = 0x4, scoped, tag = 'scoped memory for tpu_custom_call.1']
    #allocation6 [shape = 'u8[4096]{0}', space=vmem, size = 0x1000, scoped, tag = 'output window, operand 0, single buffered']
    %8 = vsyncpa [#allocation4], 0
    %9 = vsyncpa [#allocation5], 0
    // Predicated region
    $region2: #{tpu_custom_call.1} parent=1 // pred_check
      _
    $region3: #{tpu_custom_call.1} parent=1 // pred_check_branch
      %11 = sbr.rel (0) target = $region5
    $region4: #{tpu_custom_call.1} parent=1 // pred_region
      _
    $region5: #{tpu_custom_call.1} parent=1 // pred_fallthru
      _
    // Predicated region
    $region6: #{tpu_custom_call.1} parent=1 // pred_check
      _
    $region7: #{tpu_custom_call.1} parent=1 // pred_check_branch
      %13 = sbr.rel (0) target = $region9
    $region8: #{tpu_custom_call.1} parent=1 // pred_region
      _
    $region9: #{tpu_custom_call.1} parent=1 // pred_fallthru
      _
    // Predicated region
    $region10: #{tpu_custom_call.1} parent=1 // pred_check
      _
    $region11: #{tpu_custom_call.1} parent=1 // pred_check_branch
      %15 = sbr.rel (0) target = $region13
    $region12: #{tpu_custom_call.1} parent=1 // pred_region
      %s17 = ssub.s32 256, 256
      %18 = vsyncadd [#allocation4], %s17
      %s20 = sshll.u32 [#allocation3], 4
      %s21 = int_to_ptr.vmem [resolvable:$true] %s20
      %23 = dma.hbm_to_vmem [thread:$0]  %s2, 256, %s21, [#allocation4]
    $region13: #{tpu_custom_call.1} parent=1 // pred_fallthru
      _
    // Predicated region
    $region14: #{tpu_custom_call.1} parent=1 // pred_check
      _
    $region15: #{tpu_custom_call.1} parent=1 // pred_check_branch
      %25 = sbr.rel (0) target = $region17
    $region16: #{tpu_custom_call.1} parent=1 // pred_region
      %26 = dma.done [#allocation4], 256
    $region17: #{tpu_custom_call.1} parent=1 // pred_fallthru
      _
    %v27 = vld [vmem:[%s1] sm:$0xff]
    %v28 = vld [vmem:[%s1 + $0x10] sm:$0xff]
    %v29 = vld [vmem:[%s1 + $0x20] sm:$0xff]
    %v30 = vld [vmem:[%s1 + $0x30] sm:$0xff]
    %v31 = vld [vmem:[#allocation3] ss:$0 sm:$0xff]
    %v32 = vld [vmem:[#allocation3 + $0x1] ss:$0 sm:$0xff]
    %v33 = vld [vmem:[%s0] sm:$0xff]
    %v34 = vld [vmem:[%s0 + $0x8] sm:$0xff]
    %v35 = vld [vmem:[%s0 + $0x10] sm:$0xff]
    %v36 = vld [vmem:[%s0 + $0x18] sm:$0xff]
    %v37 = vld [vmem:[%s0 + $0x20] sm:$0xff]
    %v38 = vld [vmem:[%s0 + $0x28] sm:$0xff]
    %v39 = vld [vmem:[%s0 + $0x30] sm:$0xff]
    %v40 = vld [vmem:[%s0 + $0x38] sm:$0xff]
    %42 = vset.pattern.permute.xlu0 0
    %43 = vperm.xlu0 %42, %v33
    %v44 = vpop.permute.xlu0 %43
    %47 = vset.pattern.permute.xlu0 0
    %48 = vperm.xlu0 %47, %v34
    %v49 = vpop.permute.xlu0 %48
    %52 = vset.pattern.permute.xlu0 0
    %53 = vperm.xlu0 %52, %v35
    %v54 = vpop.permute.xlu0 %53
    %57 = vset.pattern.permute.xlu0 0
    %58 = vperm.xlu0 %57, %v36
    %v59 = vpop.permute.xlu0 %58
    %62 = vset.pattern.permute.xlu0 0
    %63 = vperm.xlu0 %62, %v37
    %v64 = vpop.permute.xlu0 %63
    %67 = vset.pattern.permute.xlu0 0
    %68 = vperm.xlu0 %67, %v38
    %v69 = vpop.permute.xlu0 %68
    %72 = vset.pattern.permute.xlu0 0
    %73 = vperm.xlu0 %72, %v39
    %v74 = vpop.permute.xlu0 %73
    %77 = vset.pattern.permute.xlu0 0
    %78 = vperm.xlu0 %77, %v40
    %v79 = vpop.permute.xlu0 %78
    %v81 = vmul.f32 %v44, %v31
    %v82 = vmul.f32 %v49, %v31
    %v83 = vmul.f32 %v54, %v31
    %v84 = vmul.f32 %v59, %v31
    %v85 = vmul.f32 %v64, %v31
    %v86 = vmul.f32 %v69, %v31
    %v87 = vmul.f32 %v74, %v31
    %v88 = vmul.f32 %v79, %v31
    %v89 = vadd.f32 %v81, %v32
    %v90 = vadd.f32 %v82, %v32
    %v91 = vadd.f32 %v83, %v32
    %v92 = vadd.f32 %v84, %v32
    %v93 = vadd.f32 %v85, %v32
    %v94 = vadd.f32 %v86, %v32
    %v95 = vadd.f32 %v87, %v32
    %v96 = vadd.f32 %v88, %v32
    %97 = vst [vmem:[#allocation2] sm:$0xff] %v89
    %98 = vst [vmem:[#allocation2 + $0x8] sm:$0xff] %v90
    %99 = vst [vmem:[#allocation2 + $0x10] sm:$0xff] %v91
    %100 = vst [vmem:[#allocation2 + $0x18] sm:$0xff] %v92
    %101 = vst [vmem:[#allocation2 + $0x20] sm:$0xff] %v93
    %102 = vst [vmem:[#allocation2 + $0x28] sm:$0xff] %v94
    %103 = vst [vmem:[#allocation2 + $0x30] sm:$0xff] %v95
    %104 = vst [vmem:[#allocation2 + $0x38] sm:$0xff] %v96
    %v105 = vld [vmem:[#allocation2] sm:$0xff]
    %vm106 = vcmask 261120
    %v108 = vsel %vm106, 0.0, 0
    %110 = vmatprep.subr.mxu0 0.0
    %111 = vmatpush1.msra.mxu0 %v27
    %112 = vmatprep.subr.mxu0 0.0
    %113 = vmatpush1.msra.mxu0 %v28
    %114 = vmatprep.subr.mxu0 0.0
    %115 = vmatpush1.msra.mxu0 %v29
    %116 = vmatprep.subr.mxu0 0.0
    %117 = vmatpush1.msra.mxu0 %v30
    %118 = vmatprep.subr.mxu0 0.0
    %119 = vmatpush1.msra.mxu0 0.0
    %120 = vmatprep.subr.mxu0 0.0
    %121 = vmatpush1.msra.mxu0 0.0
    %122 = vmatprep.subr.mxu0 0.0
    %123 = vmatpush1.msra.mxu0 0.0
    %124 = vmatprep.subr.mxu0 0.0
    %125 = vmatpush1.msra.mxu0 0.0
    %126 = vmatprep.subr.mxu0 0.0
    %127 = vmatpush1.msra.mxu0 0.0
    %128 = vmatprep.subr.mxu0 0.0
    %129 = vmatpush1.msra.mxu0 0.0
    %130 = vmatprep.subr.mxu0 0.0
    %131 = vmatpush1.msra.mxu0 0.0
    %132 = vmatprep.subr.mxu0 0.0
    %133 = vmatpush1.msra.mxu0 0.0
    %134 = vmatprep.subr.mxu0 0.0
    %135 = vmatpush1.msra.mxu0 0.0
    %136 = vmatprep.subr.mxu0 0.0
    %137 = vmatpush1.msra.mxu0 0.0
    %138 = vmatprep.subr.mxu0 0.0
    %139 = vmatpush1.msra.mxu0 0.0
    %140 = vmatprep.subr.mxu0 0.0
    %141 = vmatpush1.msra.mxu0 0.0
    %142 = vmatprep.subr.mxu0 0.0
    %143 = vmatpush1.msra.mxu0 0.0
    %144 = vmatprep.subr.mxu0 0.0
    %145 = vmatpush1.msra.mxu0 0.0
    %146 = vmatprep.subr.mxu0 0.0
    %147 = vmatpush1.msra.mxu0 0.0
    %148 = vmatprep.subr.mxu0 0.0
    %149 = vmatpush1.msra.mxu0 0.0
    %150 = vmatprep.subr.mxu0 0.0
    %151 = vmatpush1.msra.mxu0 0.0
    %152 = vmatprep.subr.mxu0 0.0
    %153 = vmatpush1.msra.mxu0 0.0
    %154 = vmatprep.subr.mxu0 0.0
    %155 = vmatpush1.msra.mxu0 0.0
    %156 = vmatprep.subr.mxu0 0.0
    %157 = vmatpush1.msra.mxu0 0.0
    %158 = vmatprep.subr.mxu0 0.0
    %159 = vmatpush1.msra.mxu0 0.0
    %160 = vmatprep.subr.mxu0 0.0
    %161 = vmatpush1.msra.mxu0 0.0
    %162 = vmatprep.subr.mxu0 0.0
    %163 = vmatpush1.msra.mxu0 0.0
    %164 = vmatprep.subr.mxu0 0.0
    %165 = vmatpush1.msra.mxu0 0.0
    %166 = vmatprep.subr.mxu0 0.0
    %167 = vmatpush1.msra.mxu0 0.0
    %168 = vmatprep.subr.mxu0 0.0
    %169 = vmatpush1.msra.mxu0 0.0
    %170 = vmatprep.subr.mxu0 0.0
    %171 = vmatpush1.msra.mxu0 0.0
    %172 = vmatprep.subr.mxu0 0.0
    %173 = vmatpush1.msra.mxu0 0.0
    %174 = vmatprep.mubr.f32.mxu0 0.0
    %175 = vmatmul.mubr.f32.gmra.mrb[0].mxu0 %v108
    %v176 = vpop.f32.mrb[0].mxu0
    %v177 = vadd.f32 0.0, %v176
    %v178 = vpop.f32.mrb[0].mxu0
    %179 = vdwg.mxu0
    %v180 = vadd.f32 %v105, %v177
    %v181 = vxor.u32 %v180, 2147483648
    %v182 = vmul.f32 %v181, 1.442695
    %v183 = vpow.pop %v182
    %v184 = vadd.f32 %v183, 1.0
    %v185 = vrcp.pop %v184
    %v186 = vmul.f32 1.0, %v185
    %v187 = vtanh.pop %v180
    %v188 = vmul.f32 %v186, 0.0
    %190 = vrot.lane.b32.xlu0 %v187, 64
    %v191 = vpop.permute.xlu0 %190
    %v193 = vmul.f32 %v186, %v191
    %195 = vrot.lane.b32.xlu0 %v193, 32
    %v196 = vpop.permute.xlu0 %195
    %v198 = vadd.f32 %v188, %v196
    %v199 = vtanh.pop %v198
    %201 = vrot.lane.b32.xlu0 %v199, 64
    %v202 = vpop.permute.xlu0 %201
    %v204 = vmul.f32 %v186, %v202
    %s205 = scalar_lea.vmem [#allocation2], 8
    %v206 = vld [vmem:[%s205] sm:$0xff]
    %208 = vrot.lane.b32.xlu0 %v204, 32
    %v209 = vpop.permute.xlu0 %208
    %v210 = vsel %vm106, %v209, 0
    %212 = vmatprep.subr.mxu0 0.0
    %213 = vmatpush1.msra.mxu0 %v27
    %214 = vmatprep.subr.mxu0 0.0
    %215 = vmatpush1.msra.mxu0 %v28
    %216 = vmatprep.subr.mxu0 0.0
    %217 = vmatpush1.msra.mxu0 %v29
    %218 = vmatprep.subr.mxu0 0.0
    %219 = vmatpush1.msra.mxu0 %v30
    %220 = vmatprep.subr.mxu0 0.0
    %221 = vmatpush1.msra.mxu0 0.0
    %222 = vmatprep.subr.mxu0 0.0
    %223 = vmatpush1.msra.mxu0 0.0
    %224 = vmatprep.subr.mxu0 0.0
    %225 = vmatpush1.msra.mxu0 0.0
    %226 = vmatprep.subr.mxu0 0.0
    %227 = vmatpush1.msra.mxu0 0.0
    %228 = vmatprep.subr.mxu0 0.0
    %229 = vmatpush1.msra.mxu0 0.0
    %230 = vmatprep.subr.mxu0 0.0
    %231 = vmatpush1.msra.mxu0 0.0
    %232 = vmatprep.subr.mxu0 0.0
    %233 = vmatpush1.msra.mxu0 0.0
    %234 = vmatprep.subr.mxu0 0.0
    %235 = vmatpush1.msra.mxu0 0.0
    %236 = vmatprep.subr.mxu0 0.0
    %237 = vmatpush1.msra.mxu0 0.0
    %238 = vmatprep.subr.mxu0 0.0
    %239 = vmatpush1.msra.mxu0 0.0
    %240 = vmatprep.subr.mxu0 0.0
    %241 = vmatpush1.msra.mxu0 0.0
    %242 = vmatprep.subr.mxu0 0.0
    %243 = vmatpush1.msra.mxu0 0.0
    %244 = vmatprep.subr.mxu0 0.0
    %245 = vmatpush1.msra.mxu0 0.0
    %246 = vmatprep.subr.mxu0 0.0
    %247 = vmatpush1.msra.mxu0 0.0
    %248 = vmatprep.subr.mxu0 0.0
    %249 = vmatpush1.msra.mxu0 0.0
    %250 = vmatprep.subr.mxu0 0.0
    %251 = vmatpush1.msra.mxu0 0.0
    %252 = vmatprep.subr.mxu0 0.0
    %253 = vmatpush1.msra.mxu0 0.0
    %254 = vmatprep.subr.mxu0 0.0
    %255 = vmatpush1.msra.mxu0 0.0
    %256 = vmatprep.subr.mxu0 0.0
    %257 = vmatpush1.msra.mxu0 0.0
    %258 = vmatprep.subr.mxu0 0.0
    %259 = vmatpush1.msra.mxu0 0.0
    %260 = vmatprep.subr.mxu0 0.0
    %261 = vmatpush1.msra.mxu0 0.0
    %262 = vmatprep.subr.mxu0 0.0
    %263 = vmatpush1.msra.mxu0 0.0
    %264 = vmatprep.subr.mxu0 0.0
    %265 = vmatpush1.msra.mxu0 0.0
    %266 = vmatprep.subr.mxu0 0.0
    %267 = vmatpush1.msra.mxu0 0.0
    %268 = vmatprep.subr.mxu0 0.0
    %269 = vmatpush1.msra.mxu0 0.0
    %270 = vmatprep.subr.mxu0 0.0
    %271 = vmatpush1.msra.mxu0 0.0
    %272 = vmatprep.subr.mxu0 0.0
    %273 = vmatpush1.msra.mxu0 0.0
    %274 = vmatprep.subr.mxu0 0.0
    %275 = vmatpush1.msra.mxu0 0.0
    %276 = vmatprep.mubr.f32.mxu0 0.0
    %277 = vmatmul.mubr.f32.gmra.mrb[0].mxu0 %v210
    %v278 = vpop.f32.mrb[0].mxu0
    %v279 = vadd.f32 0.0, %v278
    %v280 = vpop.f32.mrb[0].mxu0
    %281 = vdwg.mxu0
    %v282 = vadd.f32 %v206, %v279
    %v283 = vxor.u32 %v282, 2147483648
    %v284 = vmul.f32 %v283, 1.442695
    %v285 = vpow.pop %v284
    %v286 = vadd.f32 %v285, 1.0
    %v287 = vrcp.pop %v286
    %v288 = vmul.f32 1.0, %v287
    %v289 = vtanh.pop %v282
    %v290 = vmul.f32 %v288, %v198
    %292 = vrot.lane.b32.xlu0 %v289, 64
    %v293 = vpop.permute.xlu0 %292
    %v295 = vmul.f32 %v288, %v293
    %297 = vrot.lane.b32.xlu0 %v295, 32
    %v298 = vpop.permute.xlu0 %297
    %v300 = vadd.f32 %v290, %v298
    %v301 = vtanh.pop %v300
    %303 = vrot.lane.b32.xlu0 %v301, 64
    %v304 = vpop.permute.xlu0 %303
    %v306 = vmul.f32 %v288, %v304
    %s307 = scalar_lea.vmem [#allocation2], 16
    %v308 = vld [vmem:[%s307] sm:$0xff]
    %310 = vrot.lane.b32.xlu0 %v306, 32
    %v311 = vpop.permute.xlu0 %310
    %v312 = vsel %vm106, %v311, 0
    %314 = vmatprep.subr.mxu0 0.0
    %315 = vmatpush1.msra.mxu0 %v27
    %316 = vmatprep.subr.mxu0 0.0
    %317 = vmatpush1.msra.mxu0 %v28
    %318 = vmatprep.subr.mxu0 0.0
    %319 = vmatpush1.msra.mxu0 %v29
    %320 = vmatprep.subr.mxu0 0.0
    %321 = vmatpush1.msra.mxu0 %v30
    %322 = vmatprep.subr.mxu0 0.0
    %323 = vmatpush1.msra.mxu0 0.0
    %324 = vmatprep.subr.mxu0 0.0
    %325 = vmatpush1.msra.mxu0 0.0
    %326 = vmatprep.subr.mxu0 0.0
    %327 = vmatpush1.msra.mxu0 0.0
    %328 = vmatprep.subr.mxu0 0.0
    %329 = vmatpush1.msra.mxu0 0.0
    %330 = vmatprep.subr.mxu0 0.0
    %331 = vmatpush1.msra.mxu0 0.0
    %332 = vmatprep.subr.mxu0 0.0
    %333 = vmatpush1.msra.mxu0 0.0
    %334 = vmatprep.subr.mxu0 0.0
    %335 = vmatpush1.msra.mxu0 0.0
    %336 = vmatprep.subr.mxu0 0.0
    %337 = vmatpush1.msra.mxu0 0.0
    %338 = vmatprep.subr.mxu0 0.0
    %339 = vmatpush1.msra.mxu0 0.0
    %340 = vmatprep.subr.mxu0 0.0
    %341 = vmatpush1.msra.mxu0 0.0
    %342 = vmatprep.subr.mxu0 0.0
    %343 = vmatpush1.msra.mxu0 0.0
    %344 = vmatprep.subr.mxu0 0.0
    %345 = vmatpush1.msra.mxu0 0.0
    %346 = vmatprep.subr.mxu0 0.0
    %347 = vmatpush1.msra.mxu0 0.0
    %348 = vmatprep.subr.mxu0 0.0
    %349 = vmatpush1.msra.mxu0 0.0
    %350 = vmatprep.subr.mxu0 0.0
    %351 = vmatpush1.msra.mxu0 0.0
    %352 = vmatprep.subr.mxu0 0.0
    %353 = vmatpush1.msra.mxu0 0.0
    %354 = vmatprep.subr.mxu0 0.0
    %355 = vmatpush1.msra.mxu0 0.0
    %356 = vmatprep.subr.mxu0 0.0
    %357 = vmatpush1.msra.mxu0 0.0
    %358 = vmatprep.subr.mxu0 0.0
    %359 = vmatpush1.msra.mxu0 0.0
    %360 = vmatprep.subr.mxu0 0.0
    %361 = vmatpush1.msra.mxu0 0.0
    %362 = vmatprep.subr.mxu0 0.0
    %363 = vmatpush1.msra.mxu0 0.0
    %364 = vmatprep.subr.mxu0 0.0
    %365 = vmatpush1.msra.mxu0 0.0
    %366 = vmatprep.subr.mxu0 0.0
    %367 = vmatpush1.msra.mxu0 0.0
    %368 = vmatprep.subr.mxu0 0.0
    %369 = vmatpush1.msra.mxu0 0.0
    %370 = vmatprep.subr.mxu0 0.0
    %371 = vmatpush1.msra.mxu0 0.0
    %372 = vmatprep.subr.mxu0 0.0
    %373 = vmatpush1.msra.mxu0 0.0
    %374 = vmatprep.subr.mxu0 0.0
    %375 = vmatpush1.msra.mxu0 0.0
    %376 = vmatprep.subr.mxu0 0.0
    %377 = vmatpush1.msra.mxu0 0.0
    %378 = vmatprep.mubr.f32.mxu0 0.0
    %379 = vmatmul.mubr.f32.gmra.mrb[0].mxu0 %v312
    %v380 = vpop.f32.mrb[0].mxu0
    %v381 = vadd.f32 0.0, %v380
    %v382 = vpop.f32.mrb[0].mxu0
    %383 = vdwg.mxu0
    %v384 = vadd.f32 %v308, %v381
    %v385 = vxor.u32 %v384, 2147483648
    %v386 = vmul.f32 %v385, 1.442695
    %v387 = vpow.pop %v386
    %v388 = vadd.f32 %v387, 1.0
    %v389 = vrcp.pop %v388
    %v390 = vmul.f32 1.0, %v389
    %v391 = vtanh.pop %v384
    %v392 = vmul.f32 %v390, %v300
    %394 = vrot.lane.b32.xlu0 %v391, 64
    %v395 = vpop.permute.xlu0 %394
    %v397 = vmul.f32 %v390, %v395
    %399 = vrot.lane.b32.xlu0 %v397, 32
    %v400 = vpop.permute.xlu0 %399
    %v402 = vadd.f32 %v392, %v400
    %v403 = vtanh.pop %v402
    %405 = vrot.lane.b32.xlu0 %v403, 64
    %v406 = vpop.permute.xlu0 %405
    %v408 = vmul.f32 %v390, %v406
    %s409 = scalar_lea.vmem [#allocation2], 24
    %v410 = vld [vmem:[%s409] sm:$0xff]
    %412 = vrot.lane.b32.xlu0 %v408, 32
    %v413 = vpop.permute.xlu0 %412
    %v414 = vsel %vm106, %v413, 0
    %416 = vmatprep.subr.mxu0 0.0
    %417 = vmatpush1.msra.mxu0 %v27
    %418 = vmatprep.subr.mxu0 0.0
    %419 = vmatpush1.msra.mxu0 %v28
    %420 = vmatprep.subr.mxu0 0.0
    %421 = vmatpush1.msra.mxu0 %v29
    %422 = vmatprep.subr.mxu0 0.0
    %423 = vmatpush1.msra.mxu0 %v30
    %424 = vmatprep.subr.mxu0 0.0
    %425 = vmatpush1.msra.mxu0 0.0
    %426 = vmatprep.subr.mxu0 0.0
    %427 = vmatpush1.msra.mxu0 0.0
    %428 = vmatprep.subr.mxu0 0.0
    %429 = vmatpush1.msra.mxu0 0.0
    %430 = vmatprep.subr.mxu0 0.0
    %431 = vmatpush1.msra.mxu0 0.0
    %432 = vmatprep.subr.mxu0 0.0
    %433 = vmatpush1.msra.mxu0 0.0
    %434 = vmatprep.subr.mxu0 0.0
    %435 = vmatpush1.msra.mxu0 0.0
    %436 = vmatprep.subr.mxu0 0.0
    %437 = vmatpush1.msra.mxu0 0.0
    %438 = vmatprep.subr.mxu0 0.0
    %439 = vmatpush1.msra.mxu0 0.0
    %440 = vmatprep.subr.mxu0 0.0
    %441 = vmatpush1.msra.mxu0 0.0
    %442 = vmatprep.subr.mxu0 0.0
    %443 = vmatpush1.msra.mxu0 0.0
    %444 = vmatprep.subr.mxu0 0.0
    %445 = vmatpush1.msra.mxu0 0.0
    %446 = vmatprep.subr.mxu0 0.0
    %447 = vmatpush1.msra.mxu0 0.0
    %448 = vmatprep.subr.mxu0 0.0
    %449 = vmatpush1.msra.mxu0 0.0
    %450 = vmatprep.subr.mxu0 0.0
    %451 = vmatpush1.msra.mxu0 0.0
    %452 = vmatprep.subr.mxu0 0.0
    %453 = vmatpush1.msra.mxu0 0.0
    %454 = vmatprep.subr.mxu0 0.0
    %455 = vmatpush1.msra.mxu0 0.0
    %456 = vmatprep.subr.mxu0 0.0
    %457 = vmatpush1.msra.mxu0 0.0
    %458 = vmatprep.subr.mxu0 0.0
    %459 = vmatpush1.msra.mxu0 0.0
    %460 = vmatprep.subr.mxu0 0.0
    %461 = vmatpush1.msra.mxu0 0.0
    %462 = vmatprep.subr.mxu0 0.0
    %463 = vmatpush1.msra.mxu0 0.0
    %464 = vmatprep.subr.mxu0 0.0
    %465 = vmatpush1.msra.mxu0 0.0
    %466 = vmatprep.subr.mxu0 0.0
    %467 = vmatpush1.msra.mxu0 0.0
    %468 = vmatprep.subr.mxu0 0.0
    %469 = vmatpush1.msra.mxu0 0.0
    %470 = vmatprep.subr.mxu0 0.0
    %471 = vmatpush1.msra.mxu0 0.0
    %472 = vmatprep.subr.mxu0 0.0
    %473 = vmatpush1.msra.mxu0 0.0
    %474 = vmatprep.subr.mxu0 0.0
    %475 = vmatpush1.msra.mxu0 0.0
    %476 = vmatprep.subr.mxu0 0.0
    %477 = vmatpush1.msra.mxu0 0.0
    %478 = vmatprep.subr.mxu0 0.0
    %479 = vmatpush1.msra.mxu0 0.0
    %480 = vmatprep.mubr.f32.mxu0 0.0
    %481 = vmatmul.mubr.f32.gmra.mrb[0].mxu0 %v414
    %v482 = vpop.f32.mrb[0].mxu0
    %v483 = vadd.f32 0.0, %v482
    %v484 = vpop.f32.mrb[0].mxu0
    %485 = vdwg.mxu0
    %v486 = vadd.f32 %v410, %v483
    %v487 = vxor.u32 %v486, 2147483648
    %v488 = vmul.f32 %v487, 1.442695
    %v489 = vpow.pop %v488
    %v490 = vadd.f32 %v489, 1.0
    %v491 = vrcp.pop %v490
    %v492 = vmul.f32 1.0, %v491
    %v493 = vtanh.pop %v486
    %v494 = vmul.f32 %v492, %v402
    %496 = vrot.lane.b32.xlu0 %v493, 64
    %v497 = vpop.permute.xlu0 %496
    %v499 = vmul.f32 %v492, %v497
    %501 = vrot.lane.b32.xlu0 %v499, 32
    %v502 = vpop.permute.xlu0 %501
    %v504 = vadd.f32 %v494, %v502
    %v505 = vtanh.pop %v504
    %507 = vrot.lane.b32.xlu0 %v505, 64
    %v508 = vpop.permute.xlu0 %507
    %v510 = vmul.f32 %v492, %v508
    %s511 = scalar_lea.vmem [#allocation2], 32
    %v512 = vld [vmem:[%s511] sm:$0xff]
    %514 = vrot.lane.b32.xlu0 %v510, 32
    %v515 = vpop.permute.xlu0 %514
    %v516 = vsel %vm106, %v515, 0
    %518 = vmatprep.subr.mxu0 0.0
    %519 = vmatpush1.msra.mxu0 %v27
    %520 = vmatprep.subr.mxu0 0.0
    %521 = vmatpush1.msra.mxu0 %v28
    %522 = vmatprep.subr.mxu0 0.0
    %523 = vmatpush1.msra.mxu0 %v29
    %524 = vmatprep.subr.mxu0 0.0
    %525 = vmatpush1.msra.mxu0 %v30
    %526 = vmatprep.subr.mxu0 0.0
    %527 = vmatpush1.msra.mxu0 0.0
    %528 = vmatprep.subr.mxu0 0.0
    %529 = vmatpush1.msra.mxu0 0.0
    %530 = vmatprep.subr.mxu0 0.0
    %531 = vmatpush1.msra.mxu0 0.0
    %532 = vmatprep.subr.mxu0 0.0
    %533 = vmatpush1.msra.mxu0 0.0
    %534 = vmatprep.subr.mxu0 0.0
    %535 = vmatpush1.msra.mxu0 0.0
    %536 = vmatprep.subr.mxu0 0.0
    %537 = vmatpush1.msra.mxu0 0.0
    %538 = vmatprep.subr.mxu0 0.0
    %539 = vmatpush1.msra.mxu0 0.0
    %540 = vmatprep.subr.mxu0 0.0
    %541 = vmatpush1.msra.mxu0 0.0
    %542 = vmatprep.subr.mxu0 0.0
    %543 = vmatpush1.msra.mxu0 0.0
    %544 = vmatprep.subr.mxu0 0.0
    %545 = vmatpush1.msra.mxu0 0.0
    %546 = vmatprep.subr.mxu0 0.0
    %547 = vmatpush1.msra.mxu0 0.0
    %548 = vmatprep.subr.mxu0 0.0
    %549 = vmatpush1.msra.mxu0 0.0
    %550 = vmatprep.subr.mxu0 0.0
    %551 = vmatpush1.msra.mxu0 0.0
    %552 = vmatprep.subr.mxu0 0.0
    %553 = vmatpush1.msra.mxu0 0.0
    %554 = vmatprep.subr.mxu0 0.0
    %555 = vmatpush1.msra.mxu0 0.0
    %556 = vmatprep.subr.mxu0 0.0
    %557 = vmatpush1.msra.mxu0 0.0
    %558 = vmatprep.subr.mxu0 0.0
    %559 = vmatpush1.msra.mxu0 0.0
    %560 = vmatprep.subr.mxu0 0.0
    %561 = vmatpush1.msra.mxu0 0.0
    %562 = vmatprep.subr.mxu0 0.0
    %563 = vmatpush1.msra.mxu0 0.0
    %564 = vmatprep.subr.mxu0 0.0
    %565 = vmatpush1.msra.mxu0 0.0
    %566 = vmatprep.subr.mxu0 0.0
    %567 = vmatpush1.msra.mxu0 0.0
    %568 = vmatprep.subr.mxu0 0.0
    %569 = vmatpush1.msra.mxu0 0.0
    %570 = vmatprep.subr.mxu0 0.0
    %571 = vmatpush1.msra.mxu0 0.0
    %572 = vmatprep.subr.mxu0 0.0
    %573 = vmatpush1.msra.mxu0 0.0
    %574 = vmatprep.subr.mxu0 0.0
    %575 = vmatpush1.msra.mxu0 0.0
    %576 = vmatprep.subr.mxu0 0.0
    %577 = vmatpush1.msra.mxu0 0.0
    %578 = vmatprep.subr.mxu0 0.0
    %579 = vmatpush1.msra.mxu0 0.0
    %580 = vmatprep.subr.mxu0 0.0
    %581 = vmatpush1.msra.mxu0 0.0
    %582 = vmatprep.mubr.f32.mxu0 0.0
    %583 = vmatmul.mubr.f32.gmra.mrb[0].mxu0 %v516
    %v584 = vpop.f32.mrb[0].mxu0
    %v585 = vadd.f32 0.0, %v584
    %v586 = vpop.f32.mrb[0].mxu0
    %587 = vdwg.mxu0
    %v588 = vadd.f32 %v512, %v585
    %v589 = vxor.u32 %v588, 2147483648
    %v590 = vmul.f32 %v589, 1.442695
    %v591 = vpow.pop %v590
    %v592 = vadd.f32 %v591, 1.0
    %v593 = vrcp.pop %v592
    %v594 = vmul.f32 1.0, %v593
    %v595 = vtanh.pop %v588
    %v596 = vmul.f32 %v594, %v504
    %598 = vrot.lane.b32.xlu0 %v595, 64
    %v599 = vpop.permute.xlu0 %598
    %v601 = vmul.f32 %v594, %v599
    %603 = vrot.lane.b32.xlu0 %v601, 32
    %v604 = vpop.permute.xlu0 %603
    %v606 = vadd.f32 %v596, %v604
    %v607 = vtanh.pop %v606
    %609 = vrot.lane.b32.xlu0 %v607, 64
    %v610 = vpop.permute.xlu0 %609
    %v612 = vmul.f32 %v594, %v610
    %s613 = scalar_lea.vmem [#allocation2], 40
    %v614 = vld [vmem:[%s613] sm:$0xff]
    %616 = vrot.lane.b32.xlu0 %v612, 32
    %v617 = vpop.permute.xlu0 %616
    %v618 = vsel %vm106, %v617, 0
    %620 = vmatprep.subr.mxu0 0.0
    %621 = vmatpush1.msra.mxu0 %v27
    %622 = vmatprep.subr.mxu0 0.0
    %623 = vmatpush1.msra.mxu0 %v28
    %624 = vmatprep.subr.mxu0 0.0
    %625 = vmatpush1.msra.mxu0 %v29
    %626 = vmatprep.subr.mxu0 0.0
    %627 = vmatpush1.msra.mxu0 %v30
    %628 = vmatprep.subr.mxu0 0.0
    %629 = vmatpush1.msra.mxu0 0.0
    %630 = vmatprep.subr.mxu0 0.0
    %631 = vmatpush1.msra.mxu0 0.0
    %632 = vmatprep.subr.mxu0 0.0
    %633 = vmatpush1.msra.mxu0 0.0
    %634 = vmatprep.subr.mxu0 0.0
    %635 = vmatpush1.msra.mxu0 0.0
    %636 = vmatprep.subr.mxu0 0.0
    %637 = vmatpush1.msra.mxu0 0.0
    %638 = vmatprep.subr.mxu0 0.0
    %639 = vmatpush1.msra.mxu0 0.0
    %640 = vmatprep.subr.mxu0 0.0
    %641 = vmatpush1.msra.mxu0 0.0
    %642 = vmatprep.subr.mxu0 0.0
    %643 = vmatpush1.msra.mxu0 0.0
    %644 = vmatprep.subr.mxu0 0.0
    %645 = vmatpush1.msra.mxu0 0.0
    %646 = vmatprep.subr.mxu0 0.0
    %647 = vmatpush1.msra.mxu0 0.0
    %648 = vmatprep.subr.mxu0 0.0
    %649 = vmatpush1.msra.mxu0 0.0
    %650 = vmatprep.subr.mxu0 0.0
    %651 = vmatpush1.msra.mxu0 0.0
    %652 = vmatprep.subr.mxu0 0.0
    %653 = vmatpush1.msra.mxu0 0.0
    %654 = vmatprep.subr.mxu0 0.0
    %655 = vmatpush1.msra.mxu0 0.0
    %656 = vmatprep.subr.mxu0 0.0
    %657 = vmatpush1.msra.mxu0 0.0
    %658 = vmatprep.subr.mxu0 0.0
    %659 = vmatpush1.msra.mxu0 0.0
    %660 = vmatprep.subr.mxu0 0.0
    %661 = vmatpush1.msra.mxu0 0.0
    %662 = vmatprep.subr.mxu0 0.0
    %663 = vmatpush1.msra.mxu0 0.0
    %664 = vmatprep.subr.mxu0 0.0
    %665 = vmatpush1.msra.mxu0 0.0
    %666 = vmatprep.subr.mxu0 0.0
    %667 = vmatpush1.msra.mxu0 0.0
    %668 = vmatprep.subr.mxu0 0.0
    %669 = vmatpush1.msra.mxu0 0.0
    %670 = vmatprep.subr.mxu0 0.0
    %671 = vmatpush1.msra.mxu0 0.0
    %672 = vmatprep.subr.mxu0 0.0
    %673 = vmatpush1.msra.mxu0 0.0
    %674 = vmatprep.subr.mxu0 0.0
    %675 = vmatpush1.msra.mxu0 0.0
    %676 = vmatprep.subr.mxu0 0.0
    %677 = vmatpush1.msra.mxu0 0.0
    %678 = vmatprep.subr.mxu0 0.0
    %679 = vmatpush1.msra.mxu0 0.0
    %680 = vmatprep.subr.mxu0 0.0
    %681 = vmatpush1.msra.mxu0 0.0
    %682 = vmatprep.subr.mxu0 0.0
    %683 = vmatpush1.msra.mxu0 0.0
    %684 = vmatprep.mubr.f32.mxu0 0.0
    %685 = vmatmul.mubr.f32.gmra.mrb[0].mxu0 %v618
    %v686 = vpop.f32.mrb[0].mxu0
    %v687 = vadd.f32 0.0, %v686
    %v688 = vpop.f32.mrb[0].mxu0
    %689 = vdwg.mxu0
    %v690 = vadd.f32 %v614, %v687
    %v691 = vxor.u32 %v690, 2147483648
    %v692 = vmul.f32 %v691, 1.442695
    %v693 = vpow.pop %v692
    %v694 = vadd.f32 %v693, 1.0
    %v695 = vrcp.pop %v694
    %v696 = vmul.f32 1.0, %v695
    %v697 = vtanh.pop %v690
    %v698 = vmul.f32 %v696, %v606
    %700 = vrot.lane.b32.xlu0 %v697, 64
    %v701 = vpop.permute.xlu0 %700
    %v703 = vmul.f32 %v696, %v701
    %705 = vrot.lane.b32.xlu0 %v703, 32
    %v706 = vpop.permute.xlu0 %705
    %v708 = vadd.f32 %v698, %v706
    %v709 = vtanh.pop %v708
    %711 = vrot.lane.b32.xlu0 %v709, 64
    %v712 = vpop.permute.xlu0 %711
    %v714 = vmul.f32 %v696, %v712
    %s715 = scalar_lea.vmem [#allocation2], 48
    %v716 = vld [vmem:[%s715] sm:$0xff]
    %718 = vrot.lane.b32.xlu0 %v714, 32
    %v719 = vpop.permute.xlu0 %718
    %v720 = vsel %vm106, %v719, 0
    %722 = vmatprep.subr.mxu0 0.0
    %723 = vmatpush1.msra.mxu0 %v27
    %724 = vmatprep.subr.mxu0 0.0
    %725 = vmatpush1.msra.mxu0 %v28
    %726 = vmatprep.subr.mxu0 0.0
    %727 = vmatpush1.msra.mxu0 %v29
    %728 = vmatprep.subr.mxu0 0.0
    %729 = vmatpush1.msra.mxu0 %v30
    %730 = vmatprep.subr.mxu0 0.0
    %731 = vmatpush1.msra.mxu0 0.0
    %732 = vmatprep.subr.mxu0 0.0
    %733 = vmatpush1.msra.mxu0 0.0
    %734 = vmatprep.subr.mxu0 0.0
    %735 = vmatpush1.msra.mxu0 0.0
    %736 = vmatprep.subr.mxu0 0.0
    %737 = vmatpush1.msra.mxu0 0.0
    %738 = vmatprep.subr.mxu0 0.0
    %739 = vmatpush1.msra.mxu0 0.0
    %740 = vmatprep.subr.mxu0 0.0
    %741 = vmatpush1.msra.mxu0 0.0
    %742 = vmatprep.subr.mxu0 0.0
    %743 = vmatpush1.msra.mxu0 0.0
    %744 = vmatprep.subr.mxu0 0.0
    %745 = vmatpush1.msra.mxu0 0.0
    %746 = vmatprep.subr.mxu0 0.0
    %747 = vmatpush1.msra.mxu0 0.0
    %748 = vmatprep.subr.mxu0 0.0
    %749 = vmatpush1.msra.mxu0 0.0
    %750 = vmatprep.subr.mxu0 0.0
    %751 = vmatpush1.msra.mxu0 0.0
    %752 = vmatprep.subr.mxu0 0.0
    %753 = vmatpush1.msra.mxu0 0.0
    %754 = vmatprep.subr.mxu0 0.0
    %755 = vmatpush1.msra.mxu0 0.0
    %756 = vmatprep.subr.mxu0 0.0
    %757 = vmatpush1.msra.mxu0 0.0
    %758 = vmatprep.subr.mxu0 0.0
    %759 = vmatpush1.msra.mxu0 0.0
    %760 = vmatprep.subr.mxu0 0.0
    %761 = vmatpush1.msra.mxu0 0.0
    %762 = vmatprep.subr.mxu0 0.0
    %763 = vmatpush1.msra.mxu0 0.0
    %764 = vmatprep.subr.mxu0 0.0
    %765 = vmatpush1.msra.mxu0 0.0
    %766 = vmatprep.subr.mxu0 0.0
    %767 = vmatpush1.msra.mxu0 0.0
    %768 = vmatprep.subr.mxu0 0.0
    %769 = vmatpush1.msra.mxu0 0.0
    %770 = vmatprep.subr.mxu0 0.0
    %771 = vmatpush1.msra.mxu0 0.0
    %772 = vmatprep.subr.mxu0 0.0
    %773 = vmatpush1.msra.mxu0 0.0
    %774 = vmatprep.subr.mxu0 0.0
    %775 = vmatpush1.msra.mxu0 0.0
    %776 = vmatprep.subr.mxu0 0.0
    %777 = vmatpush1.msra.mxu0 0.0
    %778 = vmatprep.subr.mxu0 0.0
    %779 = vmatpush1.msra.mxu0 0.0
    %780 = vmatprep.subr.mxu0 0.0
    %781 = vmatpush1.msra.mxu0 0.0
    %782 = vmatprep.subr.mxu0 0.0
    %783 = vmatpush1.msra.mxu0 0.0
    %784 = vmatprep.subr.mxu0 0.0
    %785 = vmatpush1.msra.mxu0 0.0
    %786 = vmatprep.mubr.f32.mxu0 0.0
    %787 = vmatmul.mubr.f32.gmra.mrb[0].mxu0 %v720
    %v788 = vpop.f32.mrb[0].mxu0
    %v789 = vadd.f32 0.0, %v788
    %v790 = vpop.f32.mrb[0].mxu0
    %791 = vdwg.mxu0
    %v792 = vadd.f32 %v716, %v789
    %v793 = vxor.u32 %v792, 2147483648
    %v794 = vmul.f32 %v793, 1.442695
    %v795 = vpow.pop %v794
    %v796 = vadd.f32 %v795, 1.0
    %v797 = vrcp.pop %v796
    %v798 = vmul.f32 1.0, %v797
    %v799 = vtanh.pop %v792
    %v800 = vmul.f32 %v798, %v708
    %802 = vrot.lane.b32.xlu0 %v799, 64
    %v803 = vpop.permute.xlu0 %802
    %v805 = vmul.f32 %v798, %v803
    %807 = vrot.lane.b32.xlu0 %v805, 32
    %v808 = vpop.permute.xlu0 %807
    %v810 = vadd.f32 %v800, %v808
    %v811 = vtanh.pop %v810
    %813 = vrot.lane.b32.xlu0 %v811, 64
    %v814 = vpop.permute.xlu0 %813
    %v816 = vmul.f32 %v798, %v814
    %s817 = scalar_lea.vmem [#allocation2], 56
    %v818 = vld [vmem:[%s817] sm:$0xff]
    %820 = vrot.lane.b32.xlu0 %v816, 32
    %v821 = vpop.permute.xlu0 %820
    %v822 = vsel %vm106, %v821, 0
    %824 = vmatprep.subr.mxu0 0.0
    %825 = vmatpush1.msra.mxu0 %v27
    %826 = vmatprep.subr.mxu0 0.0
    %827 = vmatpush1.msra.mxu0 %v28
    %828 = vmatprep.subr.mxu0 0.0
    %829 = vmatpush1.msra.mxu0 %v29
    %830 = vmatprep.subr.mxu0 0.0
    %831 = vmatpush1.msra.mxu0 %v30
    %832 = vmatprep.subr.mxu0 0.0
    %833 = vmatpush1.msra.mxu0 0.0
    %834 = vmatprep.subr.mxu0 0.0
    %835 = vmatpush1.msra.mxu0 0.0
    %836 = vmatprep.subr.mxu0 0.0
    %837 = vmatpush1.msra.mxu0 0.0
    %838 = vmatprep.subr.mxu0 0.0
    %839 = vmatpush1.msra.mxu0 0.0
    %840 = vmatprep.subr.mxu0 0.0
    %841 = vmatpush1.msra.mxu0 0.0
    %842 = vmatprep.subr.mxu0 0.0
    %843 = vmatpush1.msra.mxu0 0.0
    %844 = vmatprep.subr.mxu0 0.0
    %845 = vmatpush1.msra.mxu0 0.0
    %846 = vmatprep.subr.mxu0 0.0
    %847 = vmatpush1.msra.mxu0 0.0
    %848 = vmatprep.subr.mxu0 0.0
    %849 = vmatpush1.msra.mxu0 0.0
    %850 = vmatprep.subr.mxu0 0.0
    %851 = vmatpush1.msra.mxu0 0.0
    %852 = vmatprep.subr.mxu0 0.0
    %853 = vmatpush1.msra.mxu0 0.0
    %854 = vmatprep.subr.mxu0 0.0
    %855 = vmatpush1.msra.mxu0 0.0
    %856 = vmatprep.subr.mxu0 0.0
    %857 = vmatpush1.msra.mxu0 0.0
    %858 = vmatprep.subr.mxu0 0.0
    %859 = vmatpush1.msra.mxu0 0.0
    %860 = vmatprep.subr.mxu0 0.0
    %861 = vmatpush1.msra.mxu0 0.0
    %862 = vmatprep.subr.mxu0 0.0
    %863 = vmatpush1.msra.mxu0 0.0
    %864 = vmatprep.subr.mxu0 0.0
    %865 = vmatpush1.msra.mxu0 0.0
    %866 = vmatprep.subr.mxu0 0.0
    %867 = vmatpush1.msra.mxu0 0.0
    %868 = vmatprep.subr.mxu0 0.0
    %869 = vmatpush1.msra.mxu0 0.0
    %870 = vmatprep.subr.mxu0 0.0
    %871 = vmatpush1.msra.mxu0 0.0
    %872 = vmatprep.subr.mxu0 0.0
    %873 = vmatpush1.msra.mxu0 0.0
    %874 = vmatprep.subr.mxu0 0.0
    %875 = vmatpush1.msra.mxu0 0.0
    %876 = vmatprep.subr.mxu0 0.0
    %877 = vmatpush1.msra.mxu0 0.0
    %878 = vmatprep.subr.mxu0 0.0
    %879 = vmatpush1.msra.mxu0 0.0
    %880 = vmatprep.subr.mxu0 0.0
    %881 = vmatpush1.msra.mxu0 0.0
    %882 = vmatprep.subr.mxu0 0.0
    %883 = vmatpush1.msra.mxu0 0.0
    %884 = vmatprep.subr.mxu0 0.0
    %885 = vmatpush1.msra.mxu0 0.0
    %886 = vmatprep.subr.mxu0 0.0
    %887 = vmatpush1.msra.mxu0 0.0
    %888 = vmatprep.mubr.f32.mxu0 0.0
    %889 = vmatmul.mubr.f32.gmra.mrb[0].mxu0 %v822
    %v890 = vpop.f32.mrb[0].mxu0
    %v891 = vadd.f32 0.0, %v890
    %v892 = vpop.f32.mrb[0].mxu0
    %893 = vdwg.mxu0
    %v894 = vadd.f32 %v818, %v891
    %v895 = vxor.u32 %v894, 2147483648
    %v896 = vmul.f32 %v895, 1.442695
    %v897 = vpow.pop %v896
    %v898 = vadd.f32 %v897, 1.0
    %v899 = vrcp.pop %v898
    %v900 = vmul.f32 1.0, %v899
    %v901 = vtanh.pop %v894
    %v902 = vmul.f32 %v900, %v810
    %904 = vrot.lane.b32.xlu0 %v901, 64
    %v905 = vpop.permute.xlu0 %904
    %v907 = vmul.f32 %v900, %v905
    %909 = vrot.lane.b32.xlu0 %v907, 32
    %v910 = vpop.permute.xlu0 %909
    %v912 = vadd.f32 %v902, %v910
    %v913 = vtanh.pop %v912
    %915 = vrot.lane.b32.xlu0 %v913, 64
    %v916 = vpop.permute.xlu0 %915
    %v918 = vmul.f32 %v900, %v916
    %v919 = vld [vmem:[%s1 + $0x8] sm:$0xff]
    %v920 = vld [vmem:[%s1 + $0x18] sm:$0xff]
    %v921 = vld [vmem:[%s1 + $0x28] sm:$0xff]
    %v922 = vld [vmem:[%s1 + $0x38] sm:$0xff]
    %v923 = vld [vmem:[#allocation3 + $0xa] ss:$0 sm:$0xff]
    %925 = vrot.lane.b32.xlu0 %v918, 32
    %v926 = vpop.permute.xlu0 %925
    %v927 = vsel %vm106, %v926, 0
    %929 = vmatprep.subr.mxu0 0.0
    %930 = vmatpush1.msra.mxu0 %v919
    %931 = vmatprep.subr.mxu0 0.0
    %932 = vmatpush1.msra.mxu0 %v920
    %933 = vmatprep.subr.mxu0 0.0
    %934 = vmatpush1.msra.mxu0 %v921
    %935 = vmatprep.subr.mxu0 0.0
    %936 = vmatpush1.msra.mxu0 %v922
    %937 = vmatprep.subr.mxu0 0.0
    %938 = vmatpush1.msra.mxu0 0.0
    %939 = vmatprep.subr.mxu0 0.0
    %940 = vmatpush1.msra.mxu0 0.0
    %941 = vmatprep.subr.mxu0 0.0
    %942 = vmatpush1.msra.mxu0 0.0
    %943 = vmatprep.subr.mxu0 0.0
    %944 = vmatpush1.msra.mxu0 0.0
    %945 = vmatprep.subr.mxu0 0.0
    %946 = vmatpush1.msra.mxu0 0.0
    %947 = vmatprep.subr.mxu0 0.0
    %948 = vmatpush1.msra.mxu0 0.0
    %949 = vmatprep.subr.mxu0 0.0
    %950 = vmatpush1.msra.mxu0 0.0
    %951 = vmatprep.subr.mxu0 0.0
    %952 = vmatpush1.msra.mxu0 0.0
    %953 = vmatprep.subr.mxu0 0.0
    %954 = vmatpush1.msra.mxu0 0.0
    %955 = vmatprep.subr.mxu0 0.0
    %956 = vmatpush1.msra.mxu0 0.0
    %957 = vmatprep.subr.mxu0 0.0
    %958 = vmatpush1.msra.mxu0 0.0
    %959 = vmatprep.subr.mxu0 0.0
    %960 = vmatpush1.msra.mxu0 0.0
    %961 = vmatprep.subr.mxu0 0.0
    %962 = vmatpush1.msra.mxu0 0.0
    %963 = vmatprep.subr.mxu0 0.0
    %964 = vmatpush1.msra.mxu0 0.0
    %965 = vmatprep.subr.mxu0 0.0
    %966 = vmatpush1.msra.mxu0 0.0
    %967 = vmatprep.subr.mxu0 0.0
    %968 = vmatpush1.msra.mxu0 0.0
    %969 = vmatprep.subr.mxu0 0.0
    %970 = vmatpush1.msra.mxu0 0.0
    %971 = vmatprep.subr.mxu0 0.0
    %972 = vmatpush1.msra.mxu0 0.0
    %973 = vmatprep.subr.mxu0 0.0
    %974 = vmatpush1.msra.mxu0 0.0
    %975 = vmatprep.subr.mxu0 0.0
    %976 = vmatpush1.msra.mxu0 0.0
    %977 = vmatprep.subr.mxu0 0.0
    %978 = vmatpush1.msra.mxu0 0.0
    %979 = vmatprep.subr.mxu0 0.0
    %980 = vmatpush1.msra.mxu0 0.0
    %981 = vmatprep.subr.mxu0 0.0
    %982 = vmatpush1.msra.mxu0 0.0
    %983 = vmatprep.subr.mxu0 0.0
    %984 = vmatpush1.msra.mxu0 0.0
    %985 = vmatprep.subr.mxu0 0.0
    %986 = vmatpush1.msra.mxu0 0.0
    %987 = vmatprep.subr.mxu0 0.0
    %988 = vmatpush1.msra.mxu0 0.0
    %989 = vmatprep.subr.mxu0 0.0
    %990 = vmatpush1.msra.mxu0 0.0
    %991 = vmatprep.subr.mxu0 0.0
    %992 = vmatpush1.msra.mxu0 0.0
    %993 = vmatprep.mubr.f32.mxu0 0.0
    %994 = vmatmul.mubr.f32.gmra.mrb[0].mxu0 %v927
    %v995 = vpop.f32.mrb[0].mxu0
    %v996 = vadd.f32 %v923, %v995
    %v997 = vpop.f32.mrb[0].mxu0
    %998 = vdwg.mxu0
    %999 = vst [vmem:[#allocation6] sm:$0xff] %v996
    // Predicated region
    $region18: #{tpu_custom_call.1} parent=1 // pred_check
      _
    $region19: #{tpu_custom_call.1} parent=1 // pred_check_branch
      %1001 = sbr.rel (0) target = $region21
    $region20: #{tpu_custom_call.1} parent=1 // pred_region
      %s1003 = ssub.s32 128, 128
      %1004 = vsyncadd [#allocation5], %s1003
      %s1006 = sshll.u32 [#allocation6], 4
      %s1007 = int_to_ptr.vmem [resolvable:$true] %s1006
      %1009 = dma.vmem_to_hbm [thread:$0]  %s1007, 128, %s3, [#allocation5]
    $region21: #{tpu_custom_call.1} parent=1 // pred_fallthru
      _
    // Predicated region
    $region22: #{tpu_custom_call.1} parent=1 // pred_check
      _
    $region23: #{tpu_custom_call.1} parent=1 // pred_check_branch
      %1011 = sbr.rel (0) target = $region25
    $region24: #{tpu_custom_call.1} parent=1 // pred_region
      %1012 = dma.done [#allocation5], 128
    $region25: #{tpu_custom_call.1} parent=1 // pred_fallthru
      _
    %1013 = vsyncpa [#allocation4], 1
    %1014 = vsyncpa [#allocation5], 1

</llo_original>
